<compile_context>
chip_gen: v6e
topology: v6e:2x2x1
jax: 0.10.0
libtpu: 0.0.40
codegen_flags: <defaults>
</compile_context>

<pallas_src>
import jax
import jax.numpy as jnp
from jax import lax
from jax.experimental import pallas as pl
from jax.experimental.pallas import tpu as pltpu

_EPS = 1e-12                                   # torch spectral_norm default eps
_POWER_ITER_VMEM_BYTES = 24 * 1024 * 1024      # native-dtype W budget (v7x-safe)
_MATMUL_VMEM_CAP = 48 * 1024 * 1024            # ceiling for the matmul call (v7x: 64 MiB VMEM)


# ---------------------------------------------------------------------------
# Kernel 1: one power iteration + sigma / 1/sigma (spectral-norm estimate).
# ---------------------------------------------------------------------------
def _power_iter_kernel(w_ref, u_ref, u_out_ref, v_out_ref, sigma_ref, inv_sigma_ref):
    w = w_ref[...]                             # [N, K] native dtype (no f32 copy)
    u = u_ref[...]                             # [1, N] same dtype as W

    # v = normalize(W^T u): row-vector times W; accumulate in f32 on the MXU.
    v_raw = jnp.dot(u, w, preferred_element_type=jnp.float32)          # [1, K] f32
    v_nrm = jnp.sqrt(jnp.sum(v_raw * v_raw, axis=1, keepdims=True))
    v = v_raw / jnp.maximum(v_nrm, _EPS)

    # u = normalize(W v): contract K (last dim of both operands).
    wv = lax.dot_general(v.astype(w.dtype), w, (((1,), (1,)), ((), ())),
                         preferred_element_type=jnp.float32)           # [1, N] f32
    u_nrm = jnp.sqrt(jnp.sum(wv * wv, axis=1, keepdims=True))
    u_new = wv / jnp.maximum(u_nrm, _EPS)

    sigma = jnp.sum(u_new * wv, axis=1, keepdims=True)                 # [1, 1]

    u_out_ref[...] = u_new
    v_out_ref[...] = v
    sigma_ref[...] = sigma
    inv_sigma_ref[...] = pl.reciprocal(sigma, approx=False)


def spectral_power_iteration(weight, u):
    """One power iteration.  weight: [N, K]; u: [N].

    Returns (sigma [1,1] f32, inv_sigma [1,1] f32, u_new [N] f32, v_new [K] f32).
    """
    N, K = weight.shape
    u2 = u.reshape(1, N).astype(weight.dtype)

    if weight.size * weight.dtype.itemsize <= _POWER_ITER_VMEM_BYTES:
        u_new, v_new, sigma, inv_sigma = pl.pallas_call(
            _power_iter_kernel,
            out_shape=(
                jax.ShapeDtypeStruct((1, N), jnp.float32),
                jax.ShapeDtypeStruct((1, K), jnp.float32),
                jax.ShapeDtypeStruct((1, 1), jnp.float32),
                jax.ShapeDtypeStruct((1, 1), jnp.float32),
            ),
            compiler_params=pltpu.CompilerParams(
                vmem_limit_bytes=40 * 1024 * 1024),
        )(weight, u2)
    else:
        # TODO(synk): tile the power-iteration mat-vecs over N/K for weights
        # that do not fit in VMEM; the plain-XLA fallback keeps semantics exact.
        v_raw = jnp.dot(u2, weight, preferred_element_type=jnp.float32,
                        precision=lax.Precision.HIGHEST)
        v_new = v_raw / jnp.maximum(
            jnp.sqrt(jnp.sum(v_raw * v_raw, axis=1, keepdims=True)), _EPS)
        wv = lax.dot_general(v_new.astype(weight.dtype), weight,
                             (((1,), (1,)), ((), ())),
                             preferred_element_type=jnp.float32,
                             precision=lax.Precision.HIGHEST)
        u_new = wv / jnp.maximum(
            jnp.sqrt(jnp.sum(wv * wv, axis=1, keepdims=True)), _EPS)
        sigma = jnp.sum(u_new * wv, axis=1, keepdims=True)
        inv_sigma = 1.0 / sigma

    return sigma, inv_sigma, u_new.reshape(N), v_new.reshape(K)


# ---------------------------------------------------------------------------
# Kernel 2: tiled out = img @ (inv_sigma * W)^T + b, W kept in [N, K] layout.
# ---------------------------------------------------------------------------
def _scaled_linear_accum_kernel(scale_ref, x_ref, w_ref, b_ref, o_ref):
    # f32 output: accumulate directly into the resident output tile
    # (out index_map ignores k -> block stays in VMEM across the K axis).
    k = pl.program_id(2)

    @pl.when(k == 0)
    def _():
        o_ref[...] = jnp.zeros_like(o_ref)

    # x @ W^T without materializing a transpose: contract last dims of both.
    o_ref[...] += lax.dot_general(
        x_ref[...], w_ref[...],
        dimension_numbers=(((1,), (1,)), ((), ())),
        preferred_element_type=jnp.float32)

    @pl.when(k == pl.num_programs(2) - 1)
    def _():
        o_ref[...] = o_ref[...] * scale_ref[0, 0] + b_ref[...]


def _scaled_linear_scratch_kernel(scale_ref, x_ref, w_ref, b_ref, o_ref, acc_ref):
    # Non-f32 output: f32 VMEM accumulator, cast once in the finalize.
    k = pl.program_id(2)

    @pl.when(k == 0)
    def _():
        acc_ref[...] = jnp.zeros_like(acc_ref)

    acc_ref[...] += lax.dot_general(
        x_ref[...], w_ref[...],
        dimension_numbers=(((1,), (1,)), ((), ())),
        preferred_element_type=jnp.float32)

    @pl.when(k == pl.num_programs(2) - 1)
    def _():
        o_ref[...] = (acc_ref[...] * scale_ref[0, 0]
                      + b_ref[...]).astype(o_ref.dtype)


def _round_up(x, m):
    return ((x + m - 1) // m) * m


def _tile_and_pad(dim, preferred, align):
    """Pick (tile, padded_dim): tile a multiple of `align`, padded_dim a multiple of tile.

    Prefers an exact divisor near `preferred` (no padding waste); otherwise pads
    the array up to the tile grid instead of degrading to tiny tiles.
    """
    pref = max(align, min(_round_up(preferred, align), _round_up(dim, align)))
    if dim % align == 0:
        t = pref
        floor = max(align, pref - pref // 2)
        while t >= floor:
            if dim % t == 0:
                return t, dim
            t -= align
    return pref, _round_up(dim, pref)


def scaled_linear(img, weight, bias, inv_sigma, *, tm=1024, tn=1024, tk=512,
                  compute_dtype=None):
    """out = img @ (inv_sigma * weight)^T + bias; weight in PyTorch [N, K] layout.

    compute_dtype: optionally cast img/weight (e.g. jnp.bfloat16) for the MXU;
    the accumulation and finalize stay in f32, output keeps img's dtype.
    """
    B, K = img.shape
    N, Kw = weight.shape
    assert K == Kw, (K, Kw)

    out_dtype = img.dtype
    if compute_dtype is not None:
        img = img.astype(compute_dtype)
        weight = weight.astype(compute_dtype)

    # Sublane packing: 8 rows for 4-byte, 16 for 2-byte, 32 for 1-byte dtypes.
    align_m = max(8, 32 // img.dtype.itemsize)
    tm, Bp = _tile_and_pad(B, tm, align_m)
    tn, Np = _tile_and_pad(N, tn, 128)        # lane-dense output stores
    tk, Kp = _tile_and_pad(K, tk, 128)
    grid = (Bp // tm, Np // tn, Kp // tk)

    if (Bp, Kp) != (B, K):
        img = jnp.pad(img, ((0, Bp - B), (0, Kp - K)))
    if (Np, Kp) != (N, K):
        weight = jnp.pad(weight, ((0, Np - N), (0, Kp - K)))

    if bias is None:
        b2d = jnp.zeros((1, Np), jnp.float32)
    else:
        b2d = bias.astype(jnp.float32).reshape(1, N)
        if Np != N:
            b2d = jnp.pad(b2d, ((0, 0), (0, Np - N)))
    scale = jnp.asarray(inv_sigma, dtype=jnp.float32).reshape(1, 1)

    accumulate_in_out = jnp.dtype(out_dtype) == jnp.float32
    kernel = (_scaled_linear_accum_kernel if accumulate_in_out
              else _scaled_linear_scratch_kernel)
    scratch = [] if accumulate_in_out else [pltpu.VMEM((tm, tn), jnp.float32)]

    x_isz = img.dtype.itemsize
    w_isz = weight.dtype.itemsize
    o_isz = jnp.dtype(out_dtype).itemsize
    cost = pl.CostEstimate(
        flops=2 * Bp * Kp * Np,
        transcendentals=0,
        bytes_accessed=(Bp * Kp * x_isz * (Np // tn)        # img re-read per N tile
                        + Np * Kp * w_isz * (Bp // tm)      # W re-read per B tile
                        + Bp * Np * o_isz + Np * 4))

    # VMEM budget: double-buffered input/bias/output tiles (+ acc scratch).
    vmem_need = 2 * (tm * tk * x_isz + tn * tk * w_isz + tm * tn * o_isz) + 2 * 8 * tn * 4
    if not accumulate_in_out:
        vmem_need += tm * tn * 4
    vmem_limit = int(min(max(int(vmem_need * 1.5), 32 * 1024 * 1024), _MATMUL_VMEM_CAP))

    out = pl.pallas_call(
        kernel,
        out_shape=jax.ShapeDtypeStruct((Bp, Np), out_dtype),
        grid_spec=pltpu.PrefetchScalarGridSpec(
            num_scalar_prefetch=0,
            grid=grid,
            in_specs=[
                pl.BlockSpec(memory_space=pltpu.MemorySpace.SMEM),   # 1/sigma
                pl.BlockSpec((tm, tk), lambda i, j, k: (i, k)),      # img
                pl.BlockSpec((tn, tk), lambda i, j, k: (j, k)),      # weight [N,K]
                pl.BlockSpec((1, tn), lambda i, j, k: (0, j)),       # bias (f32)
            ],
            out_specs=pl.BlockSpec((tm, tn), lambda i, j, k: (i, j)),
            scratch_shapes=scratch,
        ),
        compiler_params=pltpu.CompilerParams(
            dimension_semantics=("parallel", "parallel", "arbitrary"),
            vmem_limit_bytes=vmem_limit),
        cost_estimate=cost,
    )(scale, img, weight, b2d)

    if (Bp, Np) != (B, N):
        out = out[:B, :N]
    return out


# ---------------------------------------------------------------------------
# Module forward.
# ---------------------------------------------------------------------------
def cond_spectral_linear(inp, weight, bias, u, *, compute_dtype=None):
    """Forward of CondSpectralLinear.

    Returns ((out, label), (u_new, v_new, sigma)); the second tuple mirrors the
    u/v buffer updates torch's spectral_norm performs in-place during training.
    """
    img, label = inp
    sigma, inv_sigma, u_new, v_new = spectral_power_iteration(weight, u)
    out = scaled_linear(img, weight, bias, inv_sigma, compute_dtype=compute_dtype)
    return (out, label), (u_new, v_new, sigma)


# ---------------------------------------------------------------------------
# Demo / correctness check.
# ---------------------------------------------------------------------------
if __name__ == "__main__":
    root_key = jax.random.PRNGKey(0)

    def run_case(batch, in_features, out_features):
        key = jax.random.fold_in(root_key, batch * 7919 + out_features)
        k_img, k_w, k_b, k_u, k_lbl = jax.random.split(key, 5)

        img = jax.random.normal(k_img, (batch, in_features), jnp.float32)
        label = jax.random.randint(k_lbl, (batch,), 0, 10, dtype=jnp.int32)

        # nn.Linear default init scale; u0 mirrors spectral_norm's weight_u buffer.
        bound = 1.0 / (in_features ** 0.5)
        weight = jax.random.uniform(k_w, (out_features, in_features),
                                    jnp.float32, -bound, bound)
        bias = jax.random.uniform(k_b, (out_features,), jnp.float32, -bound, bound)
        u0 = jax.random.normal(k_u, (out_features,), jnp.float32)
        u0 = u0 / jnp.maximum(jnp.linalg.norm(u0), _EPS)

        (out, lbl), (u_new, v_new, sigma) = cond_spectral_linear(
            (img, label), weight, bias, u0)
        out = jax.block_until_ready(out)
        sigma = jax.block_until_ready(sigma)

        # Pure-JAX reference (1 power iteration, same math as torch spectral_norm).
        v_raw = u0 @ weight
        v_ref = v_raw / jnp.maximum(jnp.linalg.norm(v_raw), _EPS)
        wv = weight @ v_ref
        u_ref = wv / jnp.maximum(jnp.linalg.norm(wv), _EPS)
        sigma_ref = u_ref @ wv
        ref = img @ (weight / sigma_ref).T + bias

        assert out.shape == (batch, out_features)
        assert jnp.array_equal(lbl, label)
        assert jnp.allclose(sigma.reshape(()), sigma_ref, atol=1e-4, rtol=1e-4), (
            float(sigma.reshape(())), float(sigma_ref))
        err = float(jnp.max(jnp.abs(out - ref)))
        assert jnp.allclose(out, ref, atol=5e-3, rtol=5e-3), err

    # (1) tiny shape (full-extent blocks, grid (1,1,1));
    # (2) larger shape exercising the K reduction axis (tk=384 -> grid (1,1,2));
    # (3) awkward shape exercising the pad-and-slice path (N=72, K=100 -> 128).
    run_case(8, 32, 64)
    run_case(512, 1024, 768)
    run_case(40, 100, 72)

    print("KERNEL_OK")
</pallas_src>

<mosaic_0001>
module attributes {stable_mosaic.version = 11 : i64} {
  func.func @_power_iter_kernel(%arg0: memref<64x32xf32, #tpu.memory_space<vmem>>, %arg1: memref<1x64xf32, #tpu.memory_space<vmem>>, %arg2: memref<1x64xf32, #tpu.memory_space<vmem>>, %arg3: memref<1x32xf32, #tpu.memory_space<vmem>>, %arg4: memref<1x1xf32, #tpu.memory_space<vmem>>, %arg5: memref<1x1xf32, #tpu.memory_space<vmem>>) attributes {dimension_semantics = [], scalar_prefetch = 0 : i64, scratch_operands = 0 : i64, tpu.core_type = #tpu.core_type<tc>} {
    %c0 = arith.constant 0 : index
    %c0_0 = arith.constant 0 : index
    %0 = vector.load %arg0[%c0, %c0_0] : memref<64x32xf32, #tpu.memory_space<vmem>>, vector<64x32xf32>
    %c0_1 = arith.constant 0 : index
    %c0_2 = arith.constant 0 : index
    %1 = vector.load %arg1[%c0_1, %c0_2] : memref<1x64xf32, #tpu.memory_space<vmem>>, vector<1x64xf32>
    %cst = arith.constant dense<0.000000e+00> : vector<1x32xf32>
    %2 = tpu.matmul %1, %0, %cst {dimension_numbers = #tpu.dot_dimension_numbers<[1], [0], [0], [1], [0, 0, 1, 1], [], []>} : vector<1x64xf32>, vector<64x32xf32>, vector<1x32xf32> -> vector<1x32xf32>
    %3 = arith.mulf %2, %2 : vector<1x32xf32>
    %cst_3 = arith.constant dense<0.000000e+00> : vector<1xf32>
    %4 = vector.multi_reduction <add>, %3, %cst_3 [1] : vector<1x32xf32> to vector<1xf32>
    %5 = vector.shape_cast %4 : vector<1xf32> to vector<1x1xf32>
    %6 = math.sqrt %5 : vector<1x1xf32>
    %cst_4 = arith.constant 9.99999996E-13 : f32
    %7 = vector.broadcast %cst_4 : f32 to vector<1x1xf32>
    %8 = arith.maximumf %6, %7 : vector<1x1xf32>
    %9 = vector.broadcast %8 : vector<1x1xf32> to vector<1x32xf32>
    %10 = arith.divf %2, %9 : vector<1x32xf32>
    %cst_5 = arith.constant dense<0.000000e+00> : vector<1x64xf32>
    %11 = tpu.matmul %10, %0, %cst_5 {dimension_numbers = #tpu.dot_dimension_numbers<[1], [1], [0], [0], [0, 0, 1, 0], [], []>} : vector<1x32xf32>, vector<64x32xf32>, vector<1x64xf32> -> vector<1x64xf32>
    %12 = arith.mulf %11, %11 : vector<1x64xf32>
    %cst_6 = arith.constant dense<0.000000e+00> : vector<1xf32>
    %13 = vector.multi_reduction <add>, %12, %cst_6 [1] : vector<1x64xf32> to vector<1xf32>
    %14 = vector.shape_cast %13 : vector<1xf32> to vector<1x1xf32>
    %15 = math.sqrt %14 : vector<1x1xf32>
    %cst_7 = arith.constant 9.99999996E-13 : f32
    %16 = vector.broadcast %cst_7 : f32 to vector<1x1xf32>
    %17 = arith.maximumf %15, %16 : vector<1x1xf32>
    %18 = vector.broadcast %17 : vector<1x1xf32> to vector<1x64xf32>
    %19 = arith.divf %11, %18 : vector<1x64xf32>
    %20 = arith.mulf %19, %11 : vector<1x64xf32>
    %cst_8 = arith.constant dense<0.000000e+00> : vector<1xf32>
    %21 = vector.multi_reduction <add>, %20, %cst_8 [1] : vector<1x64xf32> to vector<1xf32>
    %22 = vector.shape_cast %21 : vector<1xf32> to vector<1x1xf32>
    %c0_9 = arith.constant 0 : index
    %c0_10 = arith.constant 0 : index
    %23 = vector.load %arg2[%c0_9, %c0_10] : memref<1x64xf32, #tpu.memory_space<vmem>>, vector<1x64xf32>
    tpu.vector_store %arg2[%c0_9, %c0_10], %19 {strides = array<i32>} : memref<1x64xf32, #tpu.memory_space<vmem>>, vector<1x64xf32>,
    %c0_11 = arith.constant 0 : index
    %c0_12 = arith.constant 0 : index
    %24 = vector.load %arg3[%c0_11, %c0_12] : memref<1x32xf32, #tpu.memory_space<vmem>>, vector<1x32xf32>
    tpu.vector_store %arg3[%c0_11, %c0_12], %10 {strides = array<i32>} : memref<1x32xf32, #tpu.memory_space<vmem>>, vector<1x32xf32>,
    %c0_13 = arith.constant 0 : index
    %c0_14 = arith.constant 0 : index
    %25 = vector.load %arg4[%c0_13, %c0_14] : memref<1x1xf32, #tpu.memory_space<vmem>>, vector<1x1xf32>
    tpu.vector_store %arg4[%c0_13, %c0_14], %22 {strides = array<i32>} : memref<1x1xf32, #tpu.memory_space<vmem>>, vector<1x1xf32>,
    %26 = tpu.reciprocal %22 : vector<1x1xf32> -> vector<1x1xf32>
    %c0_15 = arith.constant 0 : index
    %c0_16 = arith.constant 0 : index
    %27 = vector.load %arg5[%c0_15, %c0_16] : memref<1x1xf32, #tpu.memory_space<vmem>>, vector<1x1xf32>
    tpu.vector_store %arg5[%c0_15, %c0_16], %26 {strides = array<i32>} : memref<1x1xf32, #tpu.memory_space<vmem>>, vector<1x1xf32>,
    return
  }
}

</mosaic_0001>

<llo_original>
// kernel: tpu_custom_call.1
$region0: #{tpu_custom_call.1}
  #allocation0 [shape = 'u32[]', space=smem, size = 0x4, offset = 0x4, fixed_abs, tag = 'smem constant byte address 0x4 - core index']
  #allocation1 [shape = 'u32[144,128]{1,0:T(1,128)}', space=vmem, size = 0x12000, scoped, tag = 'internal scratch']
  %s0 = inlined_call_operand.vmem [shape: f32[64,32], index: 0, kind: input, shape index: {}]
  %s1 = inlined_call_operand.vmem [shape: f32[1,64], index: 1, kind: input, shape index: {}]
  %s2 = inlined_call_operand.hbm [shape: f32[1,64], index: 2, kind: output, shape index: {0}]
  %s3 = inlined_call_operand.hbm [shape: f32[1,32], index: 3, kind: output, shape index: {1}]
  %s4 = inlined_call_operand.hbm [shape: f32[1,1], index: 4, kind: output, shape index: {2}]
  %s5 = inlined_call_operand.hbm [shape: f32[1,1], index: 5, kind: output, shape index: {3}]
  %6 = xla_tuple %s2, %s3, %s4, %s5
  %s7 = sld [smem:[#allocation0]]
  $region42: #{tpu_custom_call.1} parent=0
    _
  %s9 = ssub.s32 1, %s7
  %s10 = scalar_select 0, %s9, %s7
  $region1: #{tpu_custom_call.1} parent=0
    #allocation2 [shape = 'u8[512]{0}', space=vmem, size = 0x400, scoped, tag = 'output window, operand 0, single buffered']
    #allocation3 [shape = 's32[1]{0}', space=sflag, size = 0x4, scoped, tag = 'scoped memory for tpu_custom_call.1']
    #allocation4 [shape = 'u8[512]{0}', space=vmem, size = 0x400, scoped, tag = 'output window, operand 1, single buffered']
    #allocation5 [shape = 's32[1]{0}', space=sflag, size = 0x4, scoped, tag = 'scoped memory for tpu_custom_call.1']
    #allocation6 [shape = 'u8[512]{0}', space=vmem, size = 0x400, scoped, tag = 'output window, operand 2, single buffered']
    #allocation7 [shape = 'u8[512]{0}', space=vmem, size = 0x400, scoped, tag = 'output window, operand 3, single buffered']
    #allocation8 [shape = 's32[1]{0}', space=sflag, size = 0x4, scoped, tag = 'scoped memory for tpu_custom_call.1']
    %11 = vsyncpa [#allocation3], 0
    %12 = vsyncpa [#allocation5], 0
    %13 = vsyncpa [#allocation8], 0
    // Predicated region
    $region2: #{tpu_custom_call.1} parent=1 // pred_check
      _
    $region3: #{tpu_custom_call.1} parent=1 // pred_check_branch
      %15 = sbr.rel (0) target = $region5
    $region4: #{tpu_custom_call.1} parent=1 // pred_region
      _
    $region5: #{tpu_custom_call.1} parent=1 // pred_fallthru
      _
    // Predicated region
    $region6: #{tpu_custom_call.1} parent=1 // pred_check
      _
    $region7: #{tpu_custom_call.1} parent=1 // pred_check_branch
      %17 = sbr.rel (0) target = $region9
    $region8: #{tpu_custom_call.1} parent=1 // pred_region
      _
    $region9: #{tpu_custom_call.1} parent=1 // pred_fallthru
      _
    %v18 = vld [vmem:[%s0] sm:$0xff]
    %v19 = vld [vmem:[%s0 + $0x8] sm:$0xff]
    %v20 = vld [vmem:[%s0 + $0x10] sm:$0xff]
    %v21 = vld [vmem:[%s0 + $0x18] sm:$0xff]
    %v22 = vld [vmem:[%s0 + $0x20] sm:$0xff]
    %v23 = vld [vmem:[%s0 + $0x28] sm:$0xff]
    %v24 = vld [vmem:[%s0 + $0x30] sm:$0xff]
    %v25 = vld [vmem:[%s0 + $0x38] sm:$0xff]
    %v26 = vld [vmem:[%s1] sm:$0x1]
    %vm27 = vcmask 523264
    %v29 = vsel %vm27, %v26, 0
    %31 = vmatprep.subr.mxu0 0.0
    %32 = vmatpush1.msra.mxu0 0.0
    %33 = vmatprep.subr.mxu0 0.0
    %34 = vmatpush1.msra.mxu0 0.0
    %35 = vmatprep.subr.mxu0 0.0
    %36 = vmatpush1.msra.mxu0 0.0
    %37 = vmatprep.subr.mxu0 0.0
    %38 = vmatpush1.msra.mxu0 0.0
    %39 = vmatprep.subr.mxu0 0.0
    %40 = vmatpush1.msra.mxu0 0.0
    %41 = vmatprep.subr.mxu0 0.0
    %42 = vmatpush1.msra.mxu0 0.0
    %43 = vmatprep.subr.mxu0 0.0
    %44 = vmatpush1.msra.mxu0 0.0
    %45 = vmatprep.subr.mxu0 0.0
    %46 = vmatpush1.msra.mxu0 0.0
    %47 = vmatprep.subr.mxu0 0.0
    %48 = vmatpush1.msra.mxu0 %v25
    %49 = vmatprep.subr.mxu0 0.0
    %50 = vmatpush1.msra.mxu0 %v24
    %51 = vmatprep.subr.mxu0 0.0
    %52 = vmatpush1.msra.mxu0 %v23
    %53 = vmatprep.subr.mxu0 0.0
    %54 = vmatpush1.msra.mxu0 %v22
    %55 = vmatprep.subr.mxu0 0.0
    %56 = vmatpush1.msra.mxu0 %v21
    %57 = vmatprep.subr.mxu0 0.0
    %58 = vmatpush1.msra.mxu0 %v20
    %59 = vmatprep.subr.mxu0 0.0
    %60 = vmatpush1.msra.mxu0 %v19
    %61 = vmatprep.subr.mxu0 0.0
    %62 = vmatpush1.msra.mxu0 %v18
    %63 = vmatprep.subr.mxu0 0.0
    %64 = vmatpush2.msra.mxu0 0.0
    %65 = vmatprep.subr.mxu0 0.0
    %66 = vmatpush2.msra.mxu0 0.0
    %67 = vmatprep.subr.mxu0 0.0
    %68 = vmatpush2.msra.mxu0 0.0
    %69 = vmatprep.subr.mxu0 0.0
    %70 = vmatpush2.msra.mxu0 0.0
    %71 = vmatprep.subr.mxu0 0.0
    %72 = vmatpush2.msra.mxu0 0.0
    %73 = vmatprep.subr.mxu0 0.0
    %74 = vmatpush2.msra.mxu0 0.0
    %75 = vmatprep.subr.mxu0 0.0
    %76 = vmatpush2.msra.mxu0 0.0
    %77 = vmatprep.subr.mxu0 0.0
    %78 = vmatpush2.msra.mxu0 0.0
    %79 = vmatprep.subr.mxu0 0.0
    %80 = vmatpush2.msra.mxu0 0.0
    %81 = vmatprep.subr.mxu0 0.0
    %82 = vmatpush2.msra.mxu0 0.0
    %83 = vmatprep.subr.mxu0 0.0
    %84 = vmatpush2.msra.mxu0 0.0
    %85 = vmatprep.subr.mxu0 0.0
    %86 = vmatpush2.msra.mxu0 0.0
    %87 = vmatprep.subr.mxu0 0.0
    %88 = vmatpush2.msra.mxu0 0.0
    %89 = vmatprep.subr.mxu0 0.0
    %90 = vmatpush2.msra.mxu0 0.0
    %91 = vmatprep.subr.mxu0 0.0
    %92 = vmatpush2.msra.mxu0 0.0
    %93 = vmatprep.subr.mxu0 0.0
    %94 = vmatpush2.msra.mxu0 0.0
    %95 = vmatprep.mubr.f32.mxu0 0.0
    %96 = vmatmul.mubr.f32.gmra.mxu0 %v29
    %v97 = vpop.f32.mrf.mxu0
    %v98 = vadd.f32 0.0, %v97
    %v99 = vpop.f32.mrf.mxu0
    %100 = vdwg.mxu0
    %v101 = vmul.f32 %v98, %v98
    %vm102 = vcmask 253952
    %v103 = vsel %vm102, %v101, 0.0
    %104 = vadd.xlane.f32.xlu0 %v103
    %v105 = vpop.xlane.xlu0 %104
    %v106 = vrsqrt.pop %v105
    %v107 = vmul.f32 %v105, %v106
    %vm108 = vcmp.eq.f32.partialorder %v105, inf
    %v109 = vsel %vm108, %v105, %v107
    %vm110 = vcmp.eq.f32.partialorder %v105, 0.0
    %v111 = vand.u32 %v105, 2147483648
    %v112 = vsel %vm110, %v111, %v109
    %v113 = vmax.f32 %v112, 1e-12
    %v114 = vrcp.pop %v113
    %v115 = vmul.f32 %v98, %v114
    %vm116 = vcmask 261120
    %v118 = vsel %vm116, %v115, 0
    %v121 = vsel %vm116, %v18, 0
    %v124 = vsel %vm116, %v19, 0
    %v127 = vsel %vm116, %v20, 0
    %v130 = vsel %vm116, %v21, 0
    %v133 = vsel %vm116, %v22, 0
    %v136 = vsel %vm116, %v23, 0
    %v139 = vsel %vm116, %v24, 0
    %v142 = vsel %vm116, %v25, 0
    %144 = vmatprep.subr.mxu0 0.0
    %145 = vmatpush1.xpose.msra.mxu0 0.0
    %146 = vmatprep.subr.mxu0 0.0
    %147 = vmatpush1.xpose.msra.mxu0 0.0
    %148 = vmatprep.subr.mxu0 0.0
    %149 = vmatpush1.xpose.msra.mxu0 0.0
    %150 = vmatprep.subr.mxu0 0.0
    %151 = vmatpush1.xpose.msra.mxu0 0.0
    %152 = vmatprep.subr.mxu0 0.0
    %153 = vmatpush1.xpose.msra.mxu0 0.0
    %154 = vmatprep.subr.mxu0 0.0
    %155 = vmatpush1.xpose.msra.mxu0 0.0
    %156 = vmatprep.subr.mxu0 0.0
    %157 = vmatpush1.xpose.msra.mxu0 0.0
    %158 = vmatprep.subr.mxu0 0.0
    %159 = vmatpush1.xpose.msra.mxu0 0.0
    %160 = vmatprep.subr.mxu0 0.0
    %161 = vmatpush1.xpose.msra.mxu0 %v142
    %162 = vmatprep.subr.mxu0 0.0
    %163 = vmatpush1.xpose.msra.mxu0 %v139
    %164 = vmatprep.subr.mxu0 0.0
    %165 = vmatpush1.xpose.msra.mxu0 %v136
    %166 = vmatprep.subr.mxu0 0.0
    %167 = vmatpush1.xpose.msra.mxu0 %v133
    %168 = vmatprep.subr.mxu0 0.0
    %169 = vmatpush1.xpose.msra.mxu0 %v130
    %170 = vmatprep.subr.mxu0 0.0
    %171 = vmatpush1.xpose.msra.mxu0 %v127
    %172 = vmatprep.subr.mxu0 0.0
    %173 = vmatpush1.xpose.msra.mxu0 %v124
    %174 = vmatprep.subr.mxu0 0.0
    %175 = vmatpush1.xpose.msra.mxu0 %v121
    %176 = vmatprep.subr.mxu0 0.0
    %177 = vmatpush2.xpose.msra.mxu0 0.0
    %178 = vmatprep.subr.mxu0 0.0
    %179 = vmatpush2.xpose.msra.mxu0 0.0
    %180 = vmatprep.subr.mxu0 0.0
    %181 = vmatpush2.xpose.msra.mxu0 0.0
    %182 = vmatprep.subr.mxu0 0.0
    %183 = vmatpush2.xpose.msra.mxu0 0.0
    %184 = vmatprep.subr.mxu0 0.0
    %185 = vmatpush2.xpose.msra.mxu0 0.0
    %186 = vmatprep.subr.mxu0 0.0
    %187 = vmatpush2.xpose.msra.mxu0 0.0
    %188 = vmatprep.subr.mxu0 0.0
    %189 = vmatpush2.xpose.msra.mxu0 0.0
    %190 = vmatprep.subr.mxu0 0.0
    %191 = vmatpush2.xpose.msra.mxu0 0.0
    %192 = vmatprep.subr.mxu0 0.0
    %193 = vmatpush2.xpose.msra.mxu0 0.0
    %194 = vmatprep.subr.mxu0 0.0
    %195 = vmatpush2.xpose.msra.mxu0 0.0
    %196 = vmatprep.subr.mxu0 0.0
    %197 = vmatpush2.xpose.msra.mxu0 0.0
    %198 = vmatprep.subr.mxu0 0.0
    %199 = vmatpush2.xpose.msra.mxu0 0.0
    %200 = vmatprep.subr.mxu0 0.0
    %201 = vmatpush2.xpose.msra.mxu0 0.0
    %202 = vmatprep.subr.mxu0 0.0
    %203 = vmatpush2.xpose.msra.mxu0 0.0
    %204 = vmatprep.subr.mxu0 0.0
    %205 = vmatpush2.xpose.msra.mxu0 0.0
    %206 = vmatprep.subr.mxu0 0.0
    %207 = vmatpush2.xpose.msra.mxu0 0.0
    %208 = vmatprep.mubr.f32.mxu0 0.0
    %209 = vmatmul.mubr.f32.gmra.mxu0 %v118
    %v210 = vpop.f32.mrf.mxu0
    %v211 = vadd.f32 0.0, %v210
    %v212 = vpop.f32.mrf.mxu0
    %213 = vdwg.mxu0
    %v214 = vmul.f32 %v211, %v211
    %vm215 = vcmask 516096
    %v216 = vsel %vm215, %v214, 0.0
    %217 = vadd.xlane.f32.xlu0 %v216
    %v218 = vpop.xlane.xlu0 %217
    %v219 = vrsqrt.pop %v218
    %v220 = vmul.f32 %v218, %v219
    %vm221 = vcmp.eq.f32.partialorder %v218, inf
    %v222 = vsel %vm221, %v218, %v220
    %vm223 = vcmp.eq.f32.partialorder %v218, 0.0
    %v224 = vand.u32 %v218, 2147483648
    %v225 = vsel %vm223, %v224, %v222
    %v226 = vmax.f32 %v225, 1e-12
    %v227 = vrcp.pop %v226
    %v228 = vmul.f32 %v211, %v227
    %v229 = vmul.f32 %v228, %v211
    %v230 = vsel %vm215, %v229, 0.0
    %231 = vadd.xlane.f32.xlu0 %v230
    %v232 = vpop.xlane.xlu0 %231
    %233 = vst.msk [vmem:[#allocation2] sm:$0x1] %vm215, %v228
    %234 = vst.msk [vmem:[#allocation4] sm:$0x1] %vm102, %v115
    %vm235 = vcmask 0
    %236 = vst.msk [vmem:[#allocation6] sm:$0x1] %vm235, %v232
    %v237 = vrcp.pop %v232
    %238 = vst.msk [vmem:[#allocation7] sm:$0x1] %vm235, %v237
    // Predicated region
    $region10: #{tpu_custom_call.1} parent=1 // pred_check
      _
    $region11: #{tpu_custom_call.1} parent=1 // pred_check_branch
      %240 = sbr.rel (0) target = $region13
    $region12: #{tpu_custom_call.1} parent=1 // pred_region
      %s242 = ssub.s32 16, 16
      %243 = vsyncadd [#allocation3], %s242
      %s245 = sshll.u32 [#allocation2], 4
      %s246 = int_to_ptr.vmem [resolvable:$true] %s245
      %248 = dma.vmem_to_hbm [thread:$0]  %s246, 16, %s2, [#allocation3]
    $region13: #{tpu_custom_call.1} parent=1 // pred_fallthru
      _
    // Predicated region
    $region14: #{tpu_custom_call.1} parent=1 // pred_check
      _
    $region15: #{tpu_custom_call.1} parent=1 // pred_check_branch
      %250 = sbr.rel (0) target = $region17
    $region16: #{tpu_custom_call.1} parent=1 // pred_region
      %s252 = ssub.s32 16, 16
      %253 = vsyncadd [#allocation5], %s252
      %s255 = sshll.u32 [#allocation4], 4
      %s256 = int_to_ptr.vmem [resolvable:$true] %s255
      %258 = dma.vmem_to_hbm [thread:$0]  %s256, 16, %s3, [#allocation5]
    $region17: #{tpu_custom_call.1} parent=1 // pred_fallthru
      _
    // Predicated region
    $region18: #{tpu_custom_call.1} parent=1 // pred_check
      _
    $region19: #{tpu_custom_call.1} parent=1 // pred_check_branch
      %260 = sbr.rel (0) target = $region21
    $region20: #{tpu_custom_call.1} parent=1 // pred_region
      %s262 = ssub.s32 16, 16
      %263 = vsyncadd [#allocation5], %s262
      %s265 = sshll.u32 [#allocation6], 4
      %s266 = int_to_ptr.vmem [resolvable:$true] %s265
      %268 = dma.vmem_to_hbm [thread:$0]  %s266, 16, %s4, [#allocation5]
    $region21: #{tpu_custom_call.1} parent=1 // pred_fallthru
      _
    // Predicated region
    $region22: #{tpu_custom_call.1} parent=1 // pred_check
      _
    $region23: #{tpu_custom_call.1} parent=1 // pred_check_branch
      %270 = sbr.rel (0) target = $region25
    $region24: #{tpu_custom_call.1} parent=1 // pred_region
      %s272 = ssub.s32 16, 16
      %273 = vsyncadd [#allocation8], %s272
      %s275 = sshll.u32 [#allocation7], 4
      %s276 = int_to_ptr.vmem [resolvable:$true] %s275
      %278 = dma.vmem_to_hbm [thread:$0]  %s276, 16, %s5, [#allocation8]
    $region25: #{tpu_custom_call.1} parent=1 // pred_fallthru
      _
    // Predicated region
    $region26: #{tpu_custom_call.1} parent=1 // pred_check
      _
    $region27: #{tpu_custom_call.1} parent=1 // pred_check_branch
      %280 = sbr.rel (0) target = $region29
    $region28: #{tpu_custom_call.1} parent=1 // pred_region
      %281 = dma.done [#allocation3], 16
    $region29: #{tpu_custom_call.1} parent=1 // pred_fallthru
      _
    // Predicated region
    $region30: #{tpu_custom_call.1} parent=1 // pred_check
      _
    $region31: #{tpu_custom_call.1} parent=1 // pred_check_branch
      %283 = sbr.rel (0) target = $region33
    $region32: #{tpu_custom_call.1} parent=1 // pred_region
      %284 = dma.done [#allocation5], 16
    $region33: #{tpu_custom_call.1} parent=1 // pred_fallthru
      _
    // Predicated region
    $region34: #{tpu_custom_call.1} parent=1 // pred_check
      _
    $region35: #{tpu_custom_call.1} parent=1 // pred_check_branch
      %286 = sbr.rel (0) target = $region37
    $region36: #{tpu_custom_call.1} parent=1 // pred_region
      %287 = dma.done [#allocation5], 16
    $region37: #{tpu_custom_call.1} parent=1 // pred_fallthru
      _
    // Predicated region
    $region38: #{tpu_custom_call.1} parent=1 // pred_check
      _
    $region39: #{tpu_custom_call.1} parent=1 // pred_check_branch
      %289 = sbr.rel (0) target = $region41
    $region40: #{tpu_custom_call.1} parent=1 // pred_region
      %290 = dma.done [#allocation8], 16
    $region41: #{tpu_custom_call.1} parent=1 // pred_fallthru
      _
    %291 = vsyncpa [#allocation3], 1
    %292 = vsyncpa [#allocation5], 1
    %293 = vsyncpa [#allocation8], 1

</llo_original>
